<compile_context>
chip_gen: v7x
topology: tpu7x:2x2x1
jax: 0.10.0
libtpu: 0.0.40
codegen_flags: <defaults>
</compile_context>

<pallas_src>
import functools

import jax
import jax.numpy as jnp
from jax import lax
from jax.experimental import pallas as pl
from jax.experimental.pallas import tpu as pltpu


def _round_up(x, m):
    return ((x + m - 1) // m) * m


def _cdiv(a, b):
    return -(-a // b)


# ---------------------------------------------------------------------------
# Pallas kernels
# ---------------------------------------------------------------------------
def _mm_bias_kernel(*refs, relu, has_residual):
    """patches @ (scale-folded weights) + shift [+ residual] [+ ReLU], single K step."""
    if has_residual:
        p_ref, w_ref, b_ref, r_ref, o_ref = refs
    else:
        p_ref, w_ref, b_ref, o_ref = refs
        r_ref = None
    y = jnp.dot(p_ref[...], w_ref[...], preferred_element_type=jnp.float32)
    y = y + b_ref[...]
    if has_residual:
        y = y + r_ref[...].astype(jnp.float32)
    if relu:
        y = jnp.maximum(y, 0.0)
    o_ref[...] = y.astype(o_ref.dtype)


def _mm_bias_dual_kernel(p_ref, w1_ref, b1_ref, wd_ref, bd_ref, o1_ref, od_ref):
    """Fused: block's first 3x3 conv (+ReLU) and its 1x1 downsample conv, sharing
    one patches tile (downsample weights live only in the centre-tap rows)."""
    p = p_ref[...]
    y1 = jnp.dot(p, w1_ref[...], preferred_element_type=jnp.float32) + b1_ref[...]
    o1_ref[...] = jnp.maximum(y1, 0.0).astype(o1_ref.dtype)
    yd = jnp.dot(p, wd_ref[...], preferred_element_type=jnp.float32) + bd_ref[...]
    od_ref[...] = yd.astype(od_ref.dtype)


def _maxpool_kernel(x_ref, o_ref):
    """Max-reduce over the leading "window" axis (9 shifted 3x3 windows)."""
    o_ref[...] = jnp.max(x_ref[...], axis=0)


# ---------------------------------------------------------------------------
# Glue + wrappers
# ---------------------------------------------------------------------------
def _im2col(x, kh, kw, stride, pad):
    n, h, w, c = x.shape
    ho = (h + 2 * pad - kh) // stride + 1
    wo = (w + 2 * pad - kw) // stride + 1
    xp = jnp.pad(x, ((0, 0), (pad, pad), (pad, pad), (0, 0)))
    cols = []
    for dy in range(kh):
        for dx in range(kw):
            cols.append(xp[:, dy:dy + stride * (ho - 1) + 1:stride,
                           dx:dx + stride * (wo - 1) + 1:stride, :])
    patches = jnp.concatenate(cols, axis=-1)   # (N, Ho, Wo, kh*kw*C), order (dy,dx,c)
    return patches, ho, wo


def _pick_tiles(m, cp, max_tm=512):
    """Lane-dense tn=128; tm capped at 512; try to provide >= 2 parallel grid
    steps (v7x dual TensorCore) when the problem is big enough to split."""
    tn = 128
    tm = min(_round_up(m, 8), max_tm)
    mp = _round_up(m, tm)
    if mp // tm == 1 and cp // tn == 1 and m >= 32:
        tm = _round_up(_cdiv(m, 2), 16)
        mp = _round_up(m, tm)
    return tm, mp, tn


def _fold_bn(w2d, scale, shift, kd, kp, cout, cp):
    """Fold BN scale into bf16 weights; pad weight/shift to the lane grid."""
    wq = (w2d * scale.reshape(1, -1)).astype(jnp.bfloat16)
    if (kp, cp) != (kd, cout):
        wq = jnp.pad(wq, ((0, kp - kd), (0, cp - cout)))
    b = shift.reshape(1, -1).astype(jnp.float32)
    if cp != cout:
        b = jnp.pad(b, ((0, 0), (0, cp - cout)))
    return wq, b


def conv2d_bn(x, w, bn, *, stride, pad, relu, residual=None):
    """conv (BN scale folded into bf16 weights) + shift [+ residual] [+ ReLU].
    Activations in/out are bf16 NHWC; accumulation is f32 on the MXU."""
    scale, shift = bn
    n, _, _, cin = x.shape
    kh, kw, _, cout = w.shape

    patches, ho, wo = _im2col(x.astype(jnp.bfloat16), kh, kw, stride, pad)
    m = n * ho * wo
    kd = kh * kw * cin
    kp = _round_up(kd, 128)
    cp = _round_up(cout, 128)
    tm, mp, tn = _pick_tiles(m, cp)

    p2 = patches.reshape(m, kd)
    if (mp, kp) != (m, kd):
        p2 = jnp.pad(p2, ((0, mp - m), (0, kp - kd)))
    w2, b2 = _fold_bn(w.reshape(kd, cout), scale, shift, kd, kp, cout, cp)

    operands = [p2, w2, b2]
    in_specs = [
        pl.BlockSpec((tm, kp), lambda i, j: (i, 0)),
        pl.BlockSpec((kp, tn), lambda i, j: (0, j)),
        pl.BlockSpec((1, tn), lambda i, j: (0, j)),
    ]
    has_residual = residual is not None
    if has_residual:
        r2 = residual.reshape(m, cout).astype(jnp.bfloat16)
        if (mp, cp) != (m, cout):
            r2 = jnp.pad(r2, ((0, mp - m), (0, cp - cout)))
        operands.append(r2)
        in_specs.append(pl.BlockSpec((tm, tn), lambda i, j: (i, j)))

    out = pl.pallas_call(
        functools.partial(_mm_bias_kernel, relu=relu, has_residual=has_residual),
        grid=(mp // tm, cp // tn),
        in_specs=in_specs,
        out_specs=pl.BlockSpec((tm, tn), lambda i, j: (i, j)),
        out_shape=jax.ShapeDtypeStruct((mp, cp), jnp.bfloat16),
        compiler_params=pltpu.CompilerParams(
            dimension_semantics=("parallel", "parallel")),
    )(*operands)
    return out[:m, :cout].reshape(n, ho, wo, cout)


def conv3x3_with_downsample(x, w1, bn1, wd, bnd, *, stride):
    """Fused first-3x3-conv + 1x1-downsample of a downsampling BasicBlock.

    The 1x1 stride-s pad-0 conv samples exactly the centre tap (dy=dx=1) of the
    3x3 pad-1 stride-s im2col patches, so its (scale-folded) weights are
    scattered into the centre-tap rows of a zero (kd, cout) matrix and the same
    patches tile feeds a second MXU matmul. One pallas_call, two bf16 outputs."""
    s1, sh1 = bn1
    sd, shd = bnd
    n, _, _, cin = x.shape
    kh, kw, _, cout = w1.shape            # (3, 3, cin, cout)

    patches, ho, wo = _im2col(x.astype(jnp.bfloat16), kh, kw, stride, 1)
    m = n * ho * wo
    kd = kh * kw * cin
    kp = _round_up(kd, 128)
    cp = _round_up(cout, 128)
    tm, mp, tn = _pick_tiles(m, cp)

    p2 = patches.reshape(m, kd)
    if (mp, kp) != (m, kd):
        p2 = jnp.pad(p2, ((0, mp - m), (0, kp - kd)))

    w1f, b1f = _fold_bn(w1.reshape(kd, cout), s1, sh1, kd, kp, cout, cp)
    center = (kh // 2) * kw + (kw // 2)                       # tap index 4
    wd_full = jnp.zeros((kd, cout), w1.dtype)
    wd_full = wd_full.at[center * cin:(center + 1) * cin, :].set(
        wd.reshape(cin, cout))
    wdf, bdf = _fold_bn(wd_full, sd, shd, kd, kp, cout, cp)

    o1, od = pl.pallas_call(
        _mm_bias_dual_kernel,
        grid=(mp // tm, cp // tn),
        in_specs=[
            pl.BlockSpec((tm, kp), lambda i, j: (i, 0)),
            pl.BlockSpec((kp, tn), lambda i, j: (0, j)),
            pl.BlockSpec((1, tn), lambda i, j: (0, j)),
            pl.BlockSpec((kp, tn), lambda i, j: (0, j)),
            pl.BlockSpec((1, tn), lambda i, j: (0, j)),
        ],
        out_specs=(pl.BlockSpec((tm, tn), lambda i, j: (i, j)),
                   pl.BlockSpec((tm, tn), lambda i, j: (i, j))),
        out_shape=(jax.ShapeDtypeStruct((mp, cp), jnp.bfloat16),
                   jax.ShapeDtypeStruct((mp, cp), jnp.bfloat16)),
        compiler_params=pltpu.CompilerParams(
            dimension_semantics=("parallel", "parallel")),
    )(p2, w1f, b1f, wdf, bdf)
    o1 = o1[:m, :cout].reshape(n, ho, wo, cout)
    od = od[:m, :cout].reshape(n, ho, wo, cout)
    return o1, od


def maxpool_3x3_s2_p1(x, *, lane=128, tile_rows=128):
    """3x3 stride-2 pad-1 max pool, lane-dense bf16 blocks."""
    n, h, w, c = x.shape
    ho = (h + 2 - 3) // 2 + 1
    wo = (w + 2 - 3) // 2 + 1
    neg = jnp.finfo(x.dtype).min
    xp = jnp.pad(x, ((0, 0), (1, 1), (1, 1), (0, 0)), constant_values=neg)
    wins = [xp[:, dy:dy + 2 * (ho - 1) + 1:2, dx:dx + 2 * (wo - 1) + 1:2, :]
            for dy in range(3) for dx in range(3)]
    stack = jnp.stack(wins, axis=0).reshape(9, -1)            # (9, L) lane-dense
    L = stack.shape[1]
    rows = _cdiv(L, lane)
    tr = min(tile_rows, _round_up(rows, 16))
    rows_p = _round_up(rows, tr)
    lp = rows_p * lane
    if lp != L:
        stack = jnp.pad(stack, ((0, 0), (0, lp - L)), constant_values=neg)
    stack = stack.reshape(9, rows_p, lane)

    out = pl.pallas_call(
        _maxpool_kernel,
        grid=(rows_p // tr,),
        in_specs=[pl.BlockSpec((9, tr, lane), lambda i: (0, i, 0))],
        out_specs=pl.BlockSpec((tr, lane), lambda i: (i, 0)),
        out_shape=jax.ShapeDtypeStruct((rows_p, lane), x.dtype),
        compiler_params=pltpu.CompilerParams(
            dimension_semantics=("parallel",)),
    )(stack)
    return out.reshape(-1)[:L].reshape(n, ho, wo, c)


# ---------------------------------------------------------------------------
# XLA references (per-op validation; same bf16-operand / f32-accum numerics)
# ---------------------------------------------------------------------------
def _ref_conv_bn(x, w, bn, *, stride, pad, relu, residual=None):
    scale, shift = bn
    wq = (w * scale.reshape(1, 1, 1, -1)).astype(jnp.bfloat16)
    y = lax.conv_general_dilated(
        x.astype(jnp.bfloat16), wq, (stride, stride), ((pad, pad), (pad, pad)),
        dimension_numbers=("NHWC", "HWIO", "NHWC"),
        preferred_element_type=jnp.float32)
    y = y + shift.reshape(1, 1, 1, -1)
    if residual is not None:
        y = y + residual.astype(jnp.float32)
    if relu:
        y = jnp.maximum(y, 0.0)
    return y


def _ref_conv_dual(x, w1, bn1, wd, bnd, *, stride):
    o1 = _ref_conv_bn(x, w1, bn1, stride=stride, pad=1, relu=True)
    od = _ref_conv_bn(x, wd, bnd, stride=stride, pad=0, relu=False)
    return o1, od


def _ref_maxpool(x):
    return lax.reduce_window(x.astype(jnp.float32), -jnp.inf, lax.max,
                             (1, 3, 3, 1), (1, 2, 2, 1),
                             padding=((0, 0), (1, 1), (1, 1), (0, 0)))


def _max_abs(x):
    return float(jnp.max(jnp.abs(x.astype(jnp.float32))))


def _assert_close(name, got, want, tol=1.5e-2):
    err = _max_abs(got.astype(jnp.float32) - want.astype(jnp.float32))
    scale = max(_max_abs(want), 1.0)
    assert err <= tol * scale, f"{name}: err={err:.5f} scale={scale:.3f}"


def make_checking_ops():
    """Ops that run Pallas AND the XLA reference on the same inputs, assert they
    match per-op, and propagate the Pallas result.  (An end-to-end allclose is
    not meaningful: both pipelines quantize activations to bf16 every layer, so
    tiny f32 reduction-order deltas amplify chaotically through 17 layers.)"""
    def conv(x, w, bn, **kw):
        got = conv2d_bn(x, w, bn, **kw)
        _assert_close("conv", got, _ref_conv_bn(x, w, bn, **kw))
        return got

    def conv_dual(x, w1, bn1, wd, bnd, **kw):
        got1, gotd = conv3x3_with_downsample(x, w1, bn1, wd, bnd, **kw)
        ref1, refd = _ref_conv_dual(x, w1, bn1, wd, bnd, **kw)
        _assert_close("conv_dual.main", got1, ref1)
        _assert_close("conv_dual.downsample", gotd, refd)
        return got1, gotd

    def pool(x):
        got = maxpool_3x3_s2_p1(x)
        _assert_close("maxpool", got, _ref_maxpool(x))
        return got

    return dict(conv=conv, conv_dual=conv_dual, pool=pool)


# ---------------------------------------------------------------------------
# Encoder (ResNet-18 structure; strides / downsample placement are static)
# ---------------------------------------------------------------------------
_LAYER_STRIDES = (1, 2, 2, 2)          # layer1..layer4, first block of each layer

PALLAS_OPS = dict(conv=conv2d_bn, conv_dual=conv3x3_with_downsample,
                  pool=maxpool_3x3_s2_p1)


def encoder_forward(x_nchw, params, ops=PALLAS_OPS):
    conv, conv_dual, pool = ops["conv"], ops["conv_dual"], ops["pool"]
    x = jnp.transpose(x_nchw, (0, 2, 3, 1))                  # NCHW -> NHWC

    # block1: conv7x7 s2 p3 + BN + ReLU
    x = conv(x, params["conv1"], params["bn1"], stride=2, pad=3, relu=True)
    x1 = x
    # block2: maxpool 3x3 s2 p1 + layer1; block3..5: layer2..4
    x = pool(x)
    saved = []
    for li, stride in enumerate(_LAYER_STRIDES, start=1):
        for bi, blk in enumerate(params[f"layer{li}"]):
            s = stride if bi == 0 else 1
            if "wd" in blk:
                out, identity = conv_dual(x, blk["w1"], blk["bn1"],
                                          blk["wd"], blk["bnd"], stride=s)
            else:
                out = conv(x, blk["w1"], blk["bn1"], stride=s, pad=1, relu=True)
                identity = x
            x = conv(out, blk["w2"], blk["bn2"], stride=1, pad=1, relu=True,
                     residual=identity)
        saved.append(x)
    x2, x3, x4, x5 = saved

    to_nchw = lambda t: jnp.transpose(t, (0, 3, 1, 2)).astype(jnp.float32)
    intermediate_outs = [to_nchw(t) for t in (x1, x2, x3, x4, x5)]
    return to_nchw(x), intermediate_outs


# ---------------------------------------------------------------------------
# Deterministic parameter init (BN folded to inference-mode scale/shift)
# ---------------------------------------------------------------------------
def _init_conv(key, kh, kw, cin, cout):
    fan_in = kh * kw * cin
    return (jax.random.normal(key, (kh, kw, cin, cout), jnp.float32)
            * (2.0 / fan_in) ** 0.5)


def _init_bn(key, c):
    # TODO(synk): BatchNorm is folded to inference-mode scale/shift; train-mode
    # batch statistics are not modeled.
    k1, k2, k3, k4 = jax.random.split(key, 4)
    gamma = 1.0 + 0.1 * jax.random.normal(k1, (c,), jnp.float32)
    beta = 0.1 * jax.random.normal(k2, (c,), jnp.float32)
    mean = 0.1 * jax.random.normal(k3, (c,), jnp.float32)
    var = 1.0 + 0.1 * jax.random.uniform(k4, (c,), jnp.float32)
    eps = 1e-5
    scale = gamma / jnp.sqrt(var + eps)
    shift = beta - mean * scale
    return scale, shift


def make_encoder_params(key):
    keys = iter(jax.random.split(key, 64))
    params = {
        "conv1": _init_conv(next(keys), 7, 7, 3, 64),
        "bn1": _init_bn(next(keys), 64),
    }

    def make_layer(cin, cout, stride):
        blocks = []
        for b in range(2):
            in_ch = cin if b == 0 else cout
            blk = {
                "w1": _init_conv(next(keys), 3, 3, in_ch, cout),
                "bn1": _init_bn(next(keys), cout),
                "w2": _init_conv(next(keys), 3, 3, cout, cout),
                "bn2": _init_bn(next(keys), cout),
            }
            if b == 0 and (stride != 1 or cin != cout):
                blk["wd"] = _init_conv(next(keys), 1, 1, cin, cout)
                blk["bnd"] = _init_bn(next(keys), cout)
            blocks.append(blk)
        return blocks

    params["layer1"] = make_layer(64, 64, 1)
    params["layer2"] = make_layer(64, 128, 2)
    params["layer3"] = make_layer(128, 256, 2)
    params["layer4"] = make_layer(256, 512, 2)
    return params


# ---------------------------------------------------------------------------
if __name__ == "__main__":
    key = jax.random.PRNGKey(0)
    pkey, xkey = jax.random.split(key)
    params = make_encoder_params(pkey)
    x = jax.random.normal(xkey, (2, 3, 64, 64), jnp.float32)     # NCHW input

    # 1) Per-op validation (eager): every Pallas conv/pool checked against lax
    #    on identical inputs with a tight, scale-aware tolerance.
    encoder_forward(x, params, ops=make_checking_ops())

    # 2) Full jitted Pallas forward pass.
    fwd = jax.jit(encoder_forward)
    out, inters = fwd(x, params)
    out = jax.block_until_ready(out)
    inters = jax.block_until_ready(inters)

    expected_shapes = [(2, 64, 32, 32), (2, 64, 16, 16), (2, 128, 8, 8),
                       (2, 256, 4, 4), (2, 512, 2, 2)]
    assert out.shape == (2, 512, 2, 2), out.shape
    for t, s in zip(inters, expected_shapes):
        assert t.shape == s, (t.shape, s)
    assert bool(jnp.all(jnp.isfinite(out)))
    for t in inters:
        assert bool(jnp.all(jnp.isfinite(t)))

    print("KERNEL_OK")
</pallas_src>

<mosaic_0001>
module attributes {stable_mosaic.version = 11 : i64} {
  func.func @_mm_bias_kernel(%arg0: i32, %arg1: i32, %arg2: memref<512x256xbf16, #tpu.memory_space<vmem>>, %arg3: memref<256x128xbf16, #tpu.memory_space<vmem>>, %arg4: memref<1x128xf32, #tpu.memory_space<vmem>>, %arg5: memref<512x128xbf16, #tpu.memory_space<vmem>>) attributes {dimension_semantics = [#tpu.dimension_semantics<parallel>, #tpu.dimension_semantics<parallel>], iteration_bounds = array<i64: 4, 1>, scalar_prefetch = 0 : i64, scratch_operands = 0 : i64, tpu.core_type = #tpu.core_type<tc>, window_params = [{transform_indices = @transform_0, window_bounds = array<i64: 512, 256>}, {transform_indices = @transform_1, window_bounds = array<i64: 256, 128>}, {transform_indices = @transform_2, window_bounds = array<i64: 1, 128>}, {transform_indices = @transform_3, window_bounds = array<i64: 512, 128>}]} {
    %c0 = arith.constant 0 : index
    %c0_0 = arith.constant 0 : index
    %0 = vector.load %arg2[%c0, %c0_0] : memref<512x256xbf16, #tpu.memory_space<vmem>>, vector<512x256xbf16>
    %c0_1 = arith.constant 0 : index
    %c0_2 = arith.constant 0 : index
    %1 = vector.load %arg3[%c0_1, %c0_2] : memref<256x128xbf16, #tpu.memory_space<vmem>>, vector<256x128xbf16>
    %cst = arith.constant dense<0.000000e+00> : vector<512x128xf32>
    %2 = tpu.matmul %0, %1, %cst {dimension_numbers = #tpu.dot_dimension_numbers<[1], [0], [0], [1], [0, 0, 1, 1], [], []>} : vector<512x256xbf16>, vector<256x128xbf16>, vector<512x128xf32> -> vector<512x128xf32>
    %c0_3 = arith.constant 0 : index
    %c0_4 = arith.constant 0 : index
    %3 = vector.load %arg4[%c0_3, %c0_4] : memref<1x128xf32, #tpu.memory_space<vmem>>, vector<1x128xf32>
    %4 = vector.broadcast %3 : vector<1x128xf32> to vector<512x128xf32>
    %5 = arith.addf %2, %4 : vector<512x128xf32>
    %cst_5 = arith.constant 0.000000e+00 : f32
    %6 = vector.broadcast %cst_5 : f32 to vector<512x128xf32>
    %7 = arith.maximumf %5, %6 : vector<512x128xf32>
    %8 = arith.truncf %7 : vector<512x128xf32> to vector<512x128xbf16>
    %c0_6 = arith.constant 0 : index
    %c0_7 = arith.constant 0 : index
    %9 = vector.load %arg5[%c0_6, %c0_7] : memref<512x128xbf16, #tpu.memory_space<vmem>>, vector<512x128xbf16>
    tpu.vector_store %arg5[%c0_6, %c0_7], %8 {strides = array<i32>} : memref<512x128xbf16, #tpu.memory_space<vmem>>, vector<512x128xbf16>,
    return
  }
  func.func @transform_0(%arg0: i32, %arg1: i32) -> (i32, i32) {
    %c0_i32 = arith.constant 0 : i32
    %c0_i32_0 = arith.constant 0 : i32
    return %arg0, %c0_i32 : i32, i32
  }
  func.func @transform_1(%arg0: i32, %arg1: i32) -> (i32, i32) {
    %c0_i32 = arith.constant 0 : i32
    %c0_i32_0 = arith.constant 0 : i32
    return %c0_i32, %arg1 : i32, i32
  }
  func.func @transform_2(%arg0: i32, %arg1: i32) -> (i32, i32) {
    %c0_i32 = arith.constant 0 : i32
    %c0_i32_0 = arith.constant 0 : i32
    return %c0_i32, %arg1 : i32, i32
  }
  func.func @transform_3(%arg0: i32, %arg1: i32) -> (i32, i32) {
    %c0_i32 = arith.constant 0 : i32
    return %arg0, %arg1 : i32, i32
  }
}

</mosaic_0001>

<llo_original>
// kernel: tpu_custom_call.1
$region0: #{tpu_custom_call.1}
  #allocation0 [shape = 'u32[]', space=smem, size = 0x4, offset = 0x4, fixed_abs, tag = 'smem constant byte address 0x4 - core index']
  #allocation1 [shape = 'u32[144,128]{1,0:T(1,128)}', space=vmem, size = 0x12000, scoped, tag = 'internal scratch']
  %s0 = inlined_call_operand.hbm [shape: bf16[2048,256], index: 0, kind: input, shape index: {}]
  %s1 = inlined_call_operand.hbm [shape: bf16[256,128], index: 1, kind: input, shape index: {}]
  %s2 = inlined_call_operand.vmem [shape: f32[1,128], index: 2, kind: input, shape index: {}]
  %s3 = inlined_call_operand.hbm [shape: bf16[2048,128], index: 3, kind: output, shape index: {}]
  %s4 = sld [smem:[#allocation0]]
  $region53: #{tpu_custom_call.1} parent=0
    _
  %s6 = ssub.s32 1, %s4
  %s7 = scalar_select 0, %s6, %s4
  $region1: #{tpu_custom_call.1} parent=0
    #allocation2 [shape = 'u8[524288]{0}', space=vmem, size = 0x80000, scoped, tag = 'input window, operand 0']
    #allocation3 [shape = 's32[2]{0}', space=sflag, size = 0x8, scoped, tag = 'scoped memory for tpu_custom_call.1']
    #allocation4 [shape = 's32[2]{0}', space=sflag, size = 0x8, scoped, tag = 'scoped memory for tpu_custom_call.1']
    #allocation5 [shape = 'u8[65536]{0}', space=vmem, size = 0x10000, scoped, tag = 'input window, operand 1, single buffered']
    #allocation6 [shape = 's32[1]{0}', space=sflag, size = 0x4, scoped, tag = 'scoped memory for tpu_custom_call.1']
    #allocation7 [shape = 'u8[262144]{0}', space=vmem, size = 0x40000, scoped, tag = 'output window, operand 0']
    %8 = vsyncpa [#allocation3], 0
    %s9 = scalar_lea.sflag [#allocation3], 1
    %10 = vsyncpa %s9, 0
    %11 = vsyncpa [#allocation6], 0
    %12 = vsyncpa [#allocation4], 0
    %s13 = scalar_lea.sflag [#allocation4], 1
    %14 = vsyncpa %s13, 0
    loop: start=0, step=1, limit=6
    $region2: #{tpu_custom_call.1} parent=1 // loop_pre_header
      _
    $region3: #{tpu_custom_call.1} parent=1 // loop_header
      %s16 = sphi 0, %s20
      %p17 = scmp.ge.s32.totalorder %s16, 6
      %s23 = sphi 0, %s35
      %s24 = sphi 0, %s31
      %s25 = sphi 0, %s23
      %s26 = sphi 0, %s24
      %s27 = sphi 0, %s25
      %s28 = sphi 0, %s26
      %s38 = sphi 0, %s40
      %s41 = sphi 0, %s38
      %s42 = sphi 0, %s41
      %s58 = sphi 0, %s42
      %s64 = sphi 0, %s66
      %s67 = sphi 0, %s64
      %s68 = sphi 0, %s67
      %s84 = sphi 0, %s68
      %s90 = sphi 0, %s92
      %s93 = sphi 0, %s90
      %s94 = sphi 0, %s93
      %s110 = sphi 0, %s94
      %s118 = sphi 0, %s120
      %s121 = sphi 0, %s118
      %s122 = sphi 0, %s121
      %s138 = sphi 0, %s122
    $region4: #{tpu_custom_call.1} parent=1 // loop_header_branch
      %19 = sbr.rel (%p17) target = $region8
    $region5: #{tpu_custom_call.1} parent=1 // loop_body
      %s21 = ssub.s32 %s16, 1
      %s22 = ssub.s32 %s16, 2
      %s29 = sadd.s32 1, %s24
      %p30 = scmp.ge.s32.totalorder %s29, 1
      %s31 = scalar_select %p30, 0, %s29
      %s32 = sadd.s32 1, %s23
      %s33 = scalar_select %p30, %s32, %s23
      %p34 = scmp.ge.s32.totalorder %s33, 4
      %s35 = scalar_select %p34, 0, %s33
      %s36 = ssub.s32 %s23, %s35
      %p37 = scmp.eq.s32.totalorder %s36, 0
      %s39 = sadd.s32 %s38, 1
      %s40 = scalar_select %p37, %s38, %s39
      %p43 = pneg %p37
      %p44 = scmp.eq.s32.totalorder %s16, 3
      %p45 = por %p43, %p44
      %p46 = scmp.ne.s32.totalorder %s38, %s41
      %p47 = scmp.eq.s32.totalorder %s16, 0
      %p48 = por %p46, %p47
      %p49 = scmp.ne.s32.totalorder %s38, %s41
      %p50 = scmp.eq.s32.totalorder %s21, 3
      %p51 = por %p49, %p50
      %p52 = scmp.ne.s32.totalorder %s41, %s42
      %p53 = scmp.eq.s32.totalorder %s21, 0
      %p54 = por %p52, %p53
      %p55 = scmp.ne.s32.totalorder %s41, %s42
      %p56 = scmp.eq.s32.totalorder %s22, 3
      %p57 = por %p55, %p56
      %p59 = scmp.ne.s32.totalorder %s42, %s58
      %p60 = scmp.eq.s32.totalorder %s22, 0
      %p61 = por %p59, %p60
      %s62 = ssub.s32 %s24, %s31
      %p63 = scmp.eq.s32.totalorder %s62, 0
      %s65 = sadd.s32 %s64, 1
      %s66 = scalar_select %p63, %s64, %s65
      %p69 = pneg %p63
      %p70 = scmp.eq.s32.totalorder %s16, 3
      %p71 = por %p69, %p70
      %p72 = scmp.ne.s32.totalorder %s64, %s67
      %p73 = scmp.eq.s32.totalorder %s16, 0
      %p74 = por %p72, %p73
      %p75 = scmp.ne.s32.totalorder %s64, %s67
      %p76 = scmp.eq.s32.totalorder %s21, 3
      %p77 = por %p75, %p76
      %p78 = scmp.ne.s32.totalorder %s67, %s68
      %p79 = scmp.eq.s32.totalorder %s21, 0
      %p80 = por %p78, %p79
      %p81 = scmp.ne.s32.totalorder %s67, %s68
      %p82 = scmp.eq.s32.totalorder %s22, 3
      %p83 = por %p81, %p82
      %p85 = scmp.ne.s32.totalorder %s68, %s84
      %p86 = scmp.eq.s32.totalorder %s22, 0
      %p87 = por %p85, %p86
      %s88 = ssub.s32 %s24, %s31
      %p89 = scmp.eq.s32.totalorder %s88, 0
      %s91 = sadd.s32 %s90, 1
      %s92 = scalar_select %p89, %s90, %s91
      %p95 = pneg %p89
      %p96 = scmp.eq.s32.totalorder %s16, 3
      %p97 = por %p95, %p96
      %p98 = scmp.ne.s32.totalorder %s90, %s93
      %p99 = scmp.eq.s32.totalorder %s16, 0
      %p100 = por %p98, %p99
      %p101 = scmp.ne.s32.totalorder %s90, %s93
      %p102 = scmp.eq.s32.totalorder %s21, 3
      %p103 = por %p101, %p102
      %p104 = scmp.ne.s32.totalorder %s93, %s94
      %p105 = scmp.eq.s32.totalorder %s21, 0
      %p106 = por %p104, %p105
      %p107 = scmp.ne.s32.totalorder %s93, %s94
      %p108 = scmp.eq.s32.totalorder %s22, 3
      %p109 = por %p107, %p108
      %p111 = scmp.ne.s32.totalorder %s94, %s110
      %p112 = scmp.eq.s32.totalorder %s22, 0
      %p113 = por %p111, %p112
      %s114 = ssub.s32 %s23, %s35
      %s115 = ssub.s32 %s24, %s31
      %s116 = sor.u32 %s114, %s115
      %p117 = scmp.eq.s32.totalorder %s116, 0
      %s119 = sadd.s32 %s118, 1
      %s120 = scalar_select %p117, %s118, %s119
      %p123 = pneg %p117
      %p124 = scmp.eq.s32.totalorder %s16, 3
      %p125 = por %p123, %p124
      %p126 = scmp.ne.s32.totalorder %s118, %s121
      %p127 = scmp.eq.s32.totalorder %s16, 0
      %p128 = por %p126, %p127
      %p129 = scmp.ne.s32.totalorder %s118, %s121
      %p130 = scmp.eq.s32.totalorder %s21, 3
      %p131 = por %p129, %p130
      %p132 = scmp.ne.s32.totalorder %s121, %s122
      %p133 = scmp.eq.s32.totalorder %s21, 0
      %p134 = por %p132, %p133
      %p135 = scmp.ne.s32.totalorder %s121, %s122
      %p136 = scmp.eq.s32.totalorder %s22, 3
      %p137 = por %p135, %p136
      %p139 = scmp.ne.s32.totalorder %s122, %s138
      %p140 = scmp.eq.s32.totalorder %s22, 0
      %p141 = por %p139, %p140
      %p142 = scmp.le.s32.totalorder 1, %s16
      %p143 = scmp.lt.s32.totalorder %s16, 5
      %p144 = pnand %p142, %p143
      %p145 = pneg %p144
      // Predicated region
      $region9: #{tpu_custom_call.1} parent=5 // pred_check
        _
      $region10: #{tpu_custom_call.1} parent=5 // pred_check_branch
        %147 = sbr.rel (%p144) target = $region12
      $region11: #{tpu_custom_call.1} parent=5 // pred_region
        %s148 = ssub.s32 %s16, 1
        // Predicated region
        $region13: #{tpu_custom_call.1} parent=11 // pred_check
          %p149 = pneg %p80
        $region14: #{tpu_custom_call.1} parent=11 // pred_check_branch
          %151 = sbr.rel (%p149) target = $region16
        $region15: #{tpu_custom_call.1} parent=11 // pred_region
          %s153 = ssub.s32 2048, 2048
          %154 = vsyncadd [#allocation6], %s153
          %s155 = smul.addr %s26, 64
          %s156 = scalar_lea.hbm %s1, %s155
          %s157 = sshll.u32 [#allocation5], 4
          %s158 = int_to_ptr.vmem [resolvable:$true] %s157
          %163 = dma.hbm_to_vmem [thread:$0]  %s156, 2048, %s158, [#allocation6], 64, 64, 4
        $region16: #{tpu_custom_call.1} parent=11 // pred_fallthru
          _
        // Predicated region
        $region17: #{tpu_custom_call.1} parent=11 // pred_check
          %p164 = pneg %p106
        $region18: #{tpu_custom_call.1} parent=11 // pred_check_branch
          %166 = sbr.rel (%p164) target = $region20
        $region19: #{tpu_custom_call.1} parent=11 // pred_region
          %p167 = scmp.lt.s32.totalorder %s26, 0
          %s168 = scalar_select %p167, %s26, 0
          %s169 = scalar_lea.vmem %s2, %s168
        $region20: #{tpu_custom_call.1} parent=11 // pred_fallthru
          _
      $region12: #{tpu_custom_call.1} parent=5 // pred_fallthru
        _
      %p170 = scmp.lt.s32.totalorder %s16, 4
      // Predicated region
      $region21: #{tpu_custom_call.1} parent=5 // pred_check
        %p171 = pneg %p170
      $region22: #{tpu_custom_call.1} parent=5 // pred_check_branch
        %173 = sbr.rel (%p171) target = $region24
      $region23: #{tpu_custom_call.1} parent=5 // pred_region
        // Predicated region
        $region25: #{tpu_custom_call.1} parent=23 // pred_check
          %p174 = pneg %p48
        $region26: #{tpu_custom_call.1} parent=23 // pred_check_branch
          %176 = sbr.rel (%p174) target = $region28
        $region27: #{tpu_custom_call.1} parent=23 // pred_region
          %s177 = sand.u32 %s38, 1
          %s178 = scalar_lea.sflag [#allocation3], %s177
          %s179 = sand.u32 %s38, 1
          %s180 = smul.addr %s179, 512
          %s181 = scalar_lea.vmem [#allocation2], %s180
          %s182 = smul.u32 64, %s23
          %s184 = ssub.s32 8192, 8192
          %185 = vsyncadd %s178, %s184
          %s186 = smul.addr %s182, 2
          %s187 = smul.addr %s186, 64
          %s188 = scalar_lea.hbm %s0, %s187
          %s189 = sshll.u32 %s181, 4
          %s190 = int_to_ptr.vmem [resolvable:$true] %s189
          %195 = dma.hbm_to_vmem [thread:$0]  %s188, 8192, %s190, %s178, 128, 128, 8
        $region28: #{tpu_custom_call.1} parent=23 // pred_fallthru
          _
      $region24: #{tpu_custom_call.1} parent=5 // pred_fallthru
        _
      %p196 = scmp.le.s32.totalorder 1, %s16
      %p197 = scmp.lt.s32.totalorder %s16, 5
      %p198 = pnand %p196, %p197
      %p199 = pneg %p198
      // Predicated region
      $region29: #{tpu_custom_call.1} parent=5 // pred_check
        _
      $region30: #{tpu_custom_call.1} parent=5 // pred_check_branch
        %201 = sbr.rel (%p198) target = $region32
      $region31: #{tpu_custom_call.1} parent=5 // pred_region
        %s202 = ssub.s32 %s16, 1
        %s203 = sand.u32 %s41, 1
        %s204 = scalar_lea.sflag [#allocation3], %s203
        %s205 = sand.u32 %s41, 1
        %s206 = smul.addr %s205, 512
        %s207 = scalar_lea.vmem [#allocation2], %s206
        // Predicated region
        $region33: #{tpu_custom_call.1} parent=31 // pred_check
          %p208 = pneg %p54
        $region34: #{tpu_custom_call.1} parent=31 // pred_check_branch
          %210 = sbr.rel (%p208) target = $region36
        $region35: #{tpu_custom_call.1} parent=31 // pred_region
          %211 = dma.done %s204, 8192
        $region36: #{tpu_custom_call.1} parent=31 // pred_fallthru
          _
        // Predicated region
        $region37: #{tpu_custom_call.1} parent=31 // pred_check
          %p212 = pneg %p80
        $region38: #{tpu_custom_call.1} parent=31 // pred_check_branch
          %214 = sbr.rel (%p212) target = $region40
        $region39: #{tpu_custom_call.1} parent=31 // pred_region
          %215 = dma.done [#allocation6], 2048
        $region40: #{tpu_custom_call.1} parent=31 // pred_fallthru
          _
        %s216 = sand.u32 %s41, 1
        %s217 = scalar_lea.sflag [#allocation3], %s216
        %s218 = sand.u32 %s41, 1
        %s219 = smul.addr %s218, 512
        %s220 = scalar_lea.vmem [#allocation2], %s219
        %p221 = pneg %p54
        %p222 = pneg %p51
        %p223 = pneg %p80
        %p224 = pneg %p77
        %p225 = scmp.lt.s32.totalorder %s26, 0
        %s226 = scalar_select %p225, %s26, 0
        %s227 = scalar_lea.vmem %s2, %s226
        %p228 = pneg %p106
        %p229 = pneg %p103
        %p230 = pneg %p134
        %p231 = pneg %p131
        %s232 = sand.u32 %s121, 1
        %s233 = scalar_lea.sflag [#allocation4], %s232
        %s234 = sand.u32 %s121, 1
        %s235 = smul.addr %s234, 256
        %s236 = scalar_lea.vmem [#allocation7], %s235
        %s237 = smul.u32 64, %s25
        %p238 = scmp.lt.s32.totalorder %s26, 0
        %s239 = scalar_select %p238, %s26, 0
        %s240 = scalar_lea.vmem %s2, %s239
        %s241 = smul.u32 64, %s25
        %v243 = vld [vmem:[%s207] sm:$0xff]
        %v244 = vld [vmem:[%s207 + $0x8] sm:$0xff]
        %v245 = vld [vmem:[%s207 + $0x10] sm:$0xff]
        %v246 = vld [vmem:[%s207 + $0x18] sm:$0xff]
        %v247 = vld [vmem:[%s207 + $0x20] sm:$0xff]
        %v248 = vld [vmem:[%s207 + $0x28] sm:$0xff]
        %v249 = vld [vmem:[%s207 + $0x30] sm:$0xff]
        %v250 = vld [vmem:[%s207 + $0x38] sm:$0xff]
        %v251 = vld [vmem:[%s207 + $0x40] sm:$0xff]
        %v252 = vld [vmem:[%s207 + $0x48] sm:$0xff]
        %v253 = vld [vmem:[%s207 + $0x50] sm:$0xff]
        %v254 = vld [vmem:[%s207 + $0x58] sm:$0xff]
        %v255 = vld [vmem:[%s207 + $0x60] sm:$0xff]
        %v256 = vld [vmem:[%s207 + $0x68] sm:$0xff]
        %v257 = vld [vmem:[%s207 + $0x70] sm:$0xff]
        %v258 = vld [vmem:[%s207 + $0x78] sm:$0xff]
        %v259 = vld [vmem:[%s207 + $0x80] sm:$0xff]
        %v260 = vld [vmem:[%s207 + $0x88] sm:$0xff]
        %v261 = vld [vmem:[%s207 + $0x90] sm:$0xff]
        %v262 = vld [vmem:[%s207 + $0x98] sm:$0xff]
        %v263 = vld [vmem:[%s207 + $0xa0] sm:$0xff]
        %v264 = vld [vmem:[%s207 + $0xa8] sm:$0xff]
        %v265 = vld [vmem:[%s207 + $0xb0] sm:$0xff]
        %v266 = vld [vmem:[%s207 + $0xb8] sm:$0xff]
        %v267 = vld [vmem:[%s207 + $0xc0] sm:$0xff]
        %v268 = vld [vmem:[%s207 + $0xc8] sm:$0xff]
        %v269 = vld [vmem:[%s207 + $0xd0] sm:$0xff]
        %v270 = vld [vmem:[%s207 + $0xd8] sm:$0xff]
        %v271 = vld [vmem:[%s207 + $0xe0] sm:$0xff]
        %v272 = vld [vmem:[%s207 + $0xe8] sm:$0xff]
        %v273 = vld [vmem:[%s207 + $0xf0] sm:$0xff]
        %v274 = vld [vmem:[%s207 + $0xf8] sm:$0xff]
        %v275 = vld [vmem:[%s207 + $0x100] sm:$0xff]
        %v276 = vld [vmem:[%s207 + $0x108] sm:$0xff]
        %v277 = vld [vmem:[%s207 + $0x110] sm:$0xff]
        %v278 = vld [vmem:[%s207 + $0x118] sm:$0xff]
        %v279 = vld [vmem:[%s207 + $0x120] sm:$0xff]
        %v280 = vld [vmem:[%s207 + $0x128] sm:$0xff]
        %v281 = vld [vmem:[%s207 + $0x130] sm:$0xff]
        %v282 = vld [vmem:[%s207 + $0x138] sm:$0xff]
        %v283 = vld [vmem:[%s207 + $0x140] sm:$0xff]
        %v284 = vld [vmem:[%s207 + $0x148] sm:$0xff]
        %v285 = vld [vmem:[%s207 + $0x150] sm:$0xff]
        %v286 = vld [vmem:[%s207 + $0x158] sm:$0xff]
        %v287 = vld [vmem:[%s207 + $0x160] sm:$0xff]
        %v288 = vld [vmem:[%s207 + $0x168] sm:$0xff]
        %v289 = vld [vmem:[%s207 + $0x170] sm:$0xff]
        %v290 = vld [vmem:[%s207 + $0x178] sm:$0xff]
        %v291 = vld [vmem:[%s207 + $0x180] sm:$0xff]
        %v292 = vld [vmem:[%s207 + $0x188] sm:$0xff]
        %v293 = vld [vmem:[%s207 + $0x190] sm:$0xff]
        %v294 = vld [vmem:[%s207 + $0x198] sm:$0xff]
        %v295 = vld [vmem:[%s207 + $0x1a0] sm:$0xff]
        %v296 = vld [vmem:[%s207 + $0x1a8] sm:$0xff]
        %v297 = vld [vmem:[%s207 + $0x1b0] sm:$0xff]
        %v298 = vld [vmem:[%s207 + $0x1b8] sm:$0xff]
        %v299 = vld [vmem:[%s207 + $0x1c0] sm:$0xff]
        %v300 = vld [vmem:[%s207 + $0x1c8] sm:$0xff]
        %v301 = vld [vmem:[%s207 + $0x1d0] sm:$0xff]
        %v302 = vld [vmem:[%s207 + $0x1d8] sm:$0xff]
        %v303 = vld [vmem:[%s207 + $0x1e0] sm:$0xff]
        %v304 = vld [vmem:[%s207 + $0x1e8] sm:$0xff]
        %v305 = vld [vmem:[%s207 + $0x1f0] sm:$0xff]
        %v306 = vld [vmem:[%s207 + $0x1f8] sm:$0xff]
        %v307 = vld [vmem:[#allocation5] sm:$0xf]
        %v308 = vld [vmem:[#allocation5 + $0x4] sm:$0xf]
        %v309 = vld [vmem:[#allocation5 + $0x8] sm:$0xf]
        %v310 = vld [vmem:[#allocation5 + $0xc] sm:$0xf]
        %v311 = vld [vmem:[#allocation5 + $0x10] sm:$0xf]
        %v312 = vld [vmem:[#allocation5 + $0x14] sm:$0xf]
        %v313 = vld [vmem:[#allocation5 + $0x18] sm:$0xf]
        %v314 = vld [vmem:[#allocation5 + $0x1c] sm:$0xf]
        %v315 = vld [vmem:[#allocation5 + $0x20] sm:$0xf]
        %v316 = vld [vmem:[#allocation5 + $0x24] sm:$0xf]
        %v317 = vld [vmem:[#allocation5 + $0x28] sm:$0xf]
        %v318 = vld [vmem:[#allocation5 + $0x2c] sm:$0xf]
        %v319 = vld [vmem:[#allocation5 + $0x30] sm:$0xf]
        %v320 = vld [vmem:[#allocation5 + $0x34] sm:$0xf]
        %v321 = vld [vmem:[#allocation5 + $0x38] sm:$0xf]
        %v322 = vld [vmem:[#allocation5 + $0x3c] sm:$0xf]
        %v323 = vld [vmem:[#allocation5 + $0x40] sm:$0xf]
        %v324 = vld [vmem:[#allocation5 + $0x44] sm:$0xf]
        %v325 = vld [vmem:[#allocation5 + $0x48] sm:$0xf]
        %v326 = vld [vmem:[#allocation5 + $0x4c] sm:$0xf]
        %v327 = vld [vmem:[#allocation5 + $0x50] sm:$0xf]
        %v328 = vld [vmem:[#allocation5 + $0x54] sm:$0xf]
        %v329 = vld [vmem:[#allocation5 + $0x58] sm:$0xf]
        %v330 = vld [vmem:[#allocation5 + $0x5c] sm:$0xf]
        %v331 = vld [vmem:[#allocation5 + $0x60] sm:$0xf]
        %v332 = vld [vmem:[#allocation5 + $0x64] sm:$0xf]
        %v333 = vld [vmem:[#allocation5 + $0x68] sm:$0xf]
        %v334 = vld [vmem:[#allocation5 + $0x6c] sm:$0xf]
        %v335 = vld [vmem:[#allocation5 + $0x70] sm:$0xf]
        %v336 = vld [vmem:[#allocation5 + $0x74] sm:$0xf]
        %v337 = vld [vmem:[#allocation5 + $0x78] sm:$0xf]
        %v338 = vld [vmem:[#allocation5 + $0x7c] sm:$0xf]
        %v339 = vld [vmem:[%s240] sm:$0x1]
        %v341 = vlaneseq
        %v342 = vshrl.u32 %v341, 7
        %v343 = vsub.s32 0, %v342
        %v344 = vrot.slane %v339, %v343
        %v410 = vunpack.c.l.b16 %v243
        %v411 = vunpack.c.h.b16 %v243
        %v412 = vunpack.c.l.b16 %v244
        %v413 = vunpack.c.h.b16 %v244
        %v414 = vunpack.c.l.b16 %v245
        %v415 = vunpack.c.h.b16 %v245
        %v416 = vunpack.c.l.b16 %v246
        %v417 = vunpack.c.h.b16 %v246
        %v418 = vunpack.c.l.b16 %v247
        %v419 = vunpack.c.h.b16 %v247
        %v420 = vunpack.c.l.b16 %v248
        %v421 = vunpack.c.h.b16 %v248
        %v422 = vunpack.c.l.b16 %v249
        %v423 = vunpack.c.h.b16 %v249
        %v424 = vunpack.c.l.b16 %v250
        %v425 = vunpack.c.h.b16 %v250
        %v426 = vunpack.c.l.b16 %v251
        %v427 = vunpack.c.h.b16 %v251
        %v428 = vunpack.c.l.b16 %v252
        %v429 = vunpack.c.h.b16 %v252
        %v430 = vunpack.c.l.b16 %v253
        %v431 = vunpack.c.h.b16 %v253
        %v432 = vunpack.c.l.b16 %v254
        %v433 = vunpack.c.h.b16 %v254
        %v434 = vunpack.c.l.b16 %v255
        %v435 = vunpack.c.h.b16 %v255
        %v436 = vunpack.c.l.b16 %v256
        %v437 = vunpack.c.h.b16 %v256
        %v438 = vunpack.c.l.b16 %v257
        %v439 = vunpack.c.h.b16 %v257
        %v440 = vunpack.c.l.b16 %v258
        %v441 = vunpack.c.h.b16 %v258
        %v442 = vunpack.c.l.b16 %v259
        %v443 = vunpack.c.h.b16 %v259
        %v444 = vunpack.c.l.b16 %v260
        %v445 = vunpack.c.h.b16 %v260
        %v446 = vunpack.c.l.b16 %v261
        %v447 = vunpack.c.h.b16 %v261
        %v448 = vunpack.c.l.b16 %v262
        %v449 = vunpack.c.h.b16 %v262
        %v450 = vunpack.c.l.b16 %v263
        %v451 = vunpack.c.h.b16 %v263
        %v452 = vunpack.c.l.b16 %v264
        %v453 = vunpack.c.h.b16 %v264
        %v454 = vunpack.c.l.b16 %v265
        %v455 = vunpack.c.h.b16 %v265
        %v456 = vunpack.c.l.b16 %v266
        %v457 = vunpack.c.h.b16 %v266
        %v458 = vunpack.c.l.b16 %v267
        %v459 = vunpack.c.h.b16 %v267
        %v460 = vunpack.c.l.b16 %v268
        %v461 = vunpack.c.h.b16 %v268
        %v462 = vunpack.c.l.b16 %v269
        %v463 = vunpack.c.h.b16 %v269
        %v464 = vunpack.c.l.b16 %v270
        %v465 = vunpack.c.h.b16 %v270
        %v466 = vunpack.c.l.b16 %v271
        %v467 = vunpack.c.h.b16 %v271
        %v468 = vunpack.c.l.b16 %v272
        %v469 = vunpack.c.h.b16 %v272
        %v470 = vunpack.c.l.b16 %v273
        %v471 = vunpack.c.h.b16 %v273
        %v472 = vunpack.c.l.b16 %v274
        %v473 = vunpack.c.h.b16 %v274
        %v474 = vunpack.c.l.b16 %v275
        %v475 = vunpack.c.h.b16 %v275
        %v476 = vunpack.c.l.b16 %v276
        %v477 = vunpack.c.h.b16 %v276
        %v478 = vunpack.c.l.b16 %v277
        %v479 = vunpack.c.h.b16 %v277
        %v480 = vunpack.c.l.b16 %v278
        %v481 = vunpack.c.h.b16 %v278
        %v482 = vunpack.c.l.b16 %v279
        %v483 = vunpack.c.h.b16 %v279
        %v484 = vunpack.c.l.b16 %v280
        %v485 = vunpack.c.h.b16 %v280
        %v486 = vunpack.c.l.b16 %v281
        %v487 = vunpack.c.h.b16 %v281
        %v488 = vunpack.c.l.b16 %v282
        %v489 = vunpack.c.h.b16 %v282
        %v490 = vunpack.c.l.b16 %v283
        %v491 = vunpack.c.h.b16 %v283
        %v492 = vunpack.c.l.b16 %v284
        %v493 = vunpack.c.h.b16 %v284
        %v494 = vunpack.c.l.b16 %v285
        %v495 = vunpack.c.h.b16 %v285
        %v496 = vunpack.c.l.b16 %v286
        %v497 = vunpack.c.h.b16 %v286
        %v498 = vunpack.c.l.b16 %v287
        %v499 = vunpack.c.h.b16 %v287
        %v500 = vunpack.c.l.b16 %v288
        %v501 = vunpack.c.h.b16 %v288
        %v502 = vunpack.c.l.b16 %v289
        %v503 = vunpack.c.h.b16 %v289
        %v504 = vunpack.c.l.b16 %v290
        %v505 = vunpack.c.h.b16 %v290
        %v506 = vunpack.c.l.b16 %v291
        %v507 = vunpack.c.h.b16 %v291
        %v508 = vunpack.c.l.b16 %v292
        %v509 = vunpack.c.h.b16 %v292
        %v510 = vunpack.c.l.b16 %v293
        %v511 = vunpack.c.h.b16 %v293
        %v512 = vunpack.c.l.b16 %v294
        %v513 = vunpack.c.h.b16 %v294
        %v514 = vunpack.c.l.b16 %v295
        %v515 = vunpack.c.h.b16 %v295
        %v516 = vunpack.c.l.b16 %v296
        %v517 = vunpack.c.h.b16 %v296
        %v518 = vunpack.c.l.b16 %v297
        %v519 = vunpack.c.h.b16 %v297
        %v520 = vunpack.c.l.b16 %v298
        %v521 = vunpack.c.h.b16 %v298
        %v522 = vunpack.c.l.b16 %v299
        %v523 = vunpack.c.h.b16 %v299
        %v524 = vunpack.c.l.b16 %v300
        %v525 = vunpack.c.h.b16 %v300
        %v526 = vunpack.c.l.b16 %v301
        %v527 = vunpack.c.h.b16 %v301
        %v528 = vunpack.c.l.b16 %v302
        %v529 = vunpack.c.h.b16 %v302
        %v530 = vunpack.c.l.b16 %v303
        %v531 = vunpack.c.h.b16 %v303
        %v532 = vunpack.c.l.b16 %v304
        %v533 = vunpack.c.h.b16 %v304
        %v534 = vunpack.c.l.b16 %v305
        %v535 = vunpack.c.h.b16 %v305
        %v536 = vunpack.c.l.b16 %v306
        %v537 = vunpack.c.h.b16 %v306
        %v538 = vpack.c.b16 %v412, %v410
        %v539 = vpack.c.b16 %v413, %v411
        %v540 = vpack.c.b16 %v416, %v414
        %v541 = vpack.c.b16 %v417, %v415
        %v542 = vpack.c.b16 %v420, %v418
        %v543 = vpack.c.b16 %v421, %v419
        %v544 = vpack.c.b16 %v424, %v422
        %v545 = vpack.c.b16 %v425, %v423
        %v546 = vpack.c.b16 %v428, %v426
        %v547 = vpack.c.b16 %v429, %v427
        %v548 = vpack.c.b16 %v432, %v430
        %v549 = vpack.c.b16 %v433, %v431
        %v550 = vpack.c.b16 %v436, %v434
        %v551 = vpack.c.b16 %v437, %v435
        %v552 = vpack.c.b16 %v440, %v438
        %v553 = vpack.c.b16 %v441, %v439
        %v554 = vpack.c.b16 %v444, %v442
        %v555 = vpack.c.b16 %v445, %v443
        %v556 = vpack.c.b16 %v448, %v446
        %v557 = vpack.c.b16 %v449, %v447
        %v558 = vpack.c.b16 %v452, %v450
        %v559 = vpack.c.b16 %v453, %v451
        %v560 = vpack.c.b16 %v456, %v454
        %v561 = vpack.c.b16 %v457, %v455
        %v562 = vpack.c.b16 %v460, %v458
        %v563 = vpack.c.b16 %v461, %v459
        %v564 = vpack.c.b16 %v464, %v462
        %v565 = vpack.c.b16 %v465, %v463
        %v566 = vpack.c.b16 %v468, %v466
        %v567 = vpack.c.b16 %v469, %v467
        %v568 = vpack.c.b16 %v472, %v470
        %v569 = vpack.c.b16 %v473, %v471
        %v570 = vpack.c.b16 %v476, %v474
        %v571 = vpack.c.b16 %v477, %v475
        %v572 = vpack.c.b16 %v480, %v478
        %v573 = vpack.c.b16 %v481, %v479
        %v574 = vpack.c.b16 %v484, %v482
        %v575 = vpack.c.b16 %v485, %v483
        %v576 = vpack.c.b16 %v488, %v486
        %v577 = vpack.c.b16 %v489, %v487
        %v578 = vpack.c.b16 %v492, %v490
        %v579 = vpack.c.b16 %v493, %v491
        %v580 = vpack.c.b16 %v496, %v494
        %v581 = vpack.c.b16 %v497, %v495
        %v582 = vpack.c.b16 %v500, %v498
        %v583 = vpack.c.b16 %v501, %v499
        %v584 = vpack.c.b16 %v504, %v502
        %v585 = vpack.c.b16 %v505, %v503
        %v586 = vpack.c.b16 %v508, %v506
        %v587 = vpack.c.b16 %v509, %v507
        %v588 = vpack.c.b16 %v512, %v510
        %v589 = vpack.c.b16 %v513, %v511
        %v590 = vpack.c.b16 %v516, %v514
        %v591 = vpack.c.b16 %v517, %v515
        %v592 = vpack.c.b16 %v520, %v518
        %v593 = vpack.c.b16 %v521, %v519
        %v594 = vpack.c.b16 %v524, %v522
        %v595 = vpack.c.b16 %v525, %v523
        %v596 = vpack.c.b16 %v528, %v526
        %v597 = vpack.c.b16 %v529, %v527
        %v598 = vpack.c.b16 %v532, %v530
        %v599 = vpack.c.b16 %v533, %v531
        %v600 = vpack.c.b16 %v536, %v534
        %v601 = vpack.c.b16 %v537, %v535
        %v698 = vunpack.c.l.b16 %v307
        %v699 = vunpack.c.l.b16 %v308
        %v700 = vunpack.c.l.b16 %v309
        %v701 = vunpack.c.l.b16 %v310
        %v702 = vunpack.c.l.b16 %v311
        %v703 = vunpack.c.l.b16 %v312
        %v704 = vunpack.c.l.b16 %v313
        %v705 = vunpack.c.l.b16 %v314
        %v706 = vunpack.c.l.b16 %v315
        %v707 = vunpack.c.l.b16 %v316
        %v708 = vunpack.c.l.b16 %v317
        %v709 = vunpack.c.l.b16 %v318
        %v710 = vunpack.c.l.b16 %v319
        %v711 = vunpack.c.l.b16 %v320
        %v712 = vunpack.c.l.b16 %v321
        %v713 = vunpack.c.l.b16 %v322
        %v714 = vunpack.c.l.b16 %v323
        %v715 = vunpack.c.l.b16 %v324
        %v716 = vunpack.c.l.b16 %v325
        %v717 = vunpack.c.l.b16 %v326
        %v718 = vunpack.c.l.b16 %v327
        %v719 = vunpack.c.l.b16 %v328
        %v720 = vunpack.c.l.b16 %v329
        %v721 = vunpack.c.l.b16 %v330
        %v722 = vunpack.c.l.b16 %v331
        %v723 = vunpack.c.l.b16 %v332
        %v724 = vunpack.c.l.b16 %v333
        %v725 = vunpack.c.l.b16 %v334
        %v726 = vunpack.c.l.b16 %v335
        %v727 = vunpack.c.l.b16 %v336
        %v728 = vunpack.c.l.b16 %v337
        %v729 = vunpack.c.l.b16 %v338
        %v730 = vpack.c.b16 %v699, %v698
        %v731 = vpack.c.b16 %v701, %v700
        %v732 = vpack.c.b16 %v703, %v702
        %v733 = vpack.c.b16 %v705, %v704
        %v734 = vpack.c.b16 %v707, %v706
        %v735 = vpack.c.b16 %v709, %v708
        %v736 = vpack.c.b16 %v711, %v710
        %v737 = vpack.c.b16 %v713, %v712
        %v738 = vpack.c.b16 %v715, %v714
        %v739 = vpack.c.b16 %v717, %v716
        %v740 = vpack.c.b16 %v719, %v718
        %v741 = vpack.c.b16 %v721, %v720
        %v742 = vpack.c.b16 %v723, %v722
        %v743 = vpack.c.b16 %v725, %v724
        %v744 = vpack.c.b16 %v727, %v726
        %v745 = vpack.c.b16 %v729, %v728
        %762 = vmatprep.subr.bf16.mxu0 0
        %763 = vmatpush1.bf16.msra.mxu0 %v730
        %764 = vmatprep.subr.bf16.mxu0 0
        %765 = vmatpush1.bf16.msra.mxu0 %v731
        %766 = vmatprep.subr.bf16.mxu0 0
        %767 = vmatpush1.bf16.msra.mxu0 %v732
        %768 = vmatprep.subr.bf16.mxu0 0
        %769 = vmatpush1.bf16.msra.mxu0 %v733
        %770 = vmatprep.subr.bf16.mxu0 0
        %771 = vmatpush1.bf16.msra.mxu0 %v734
        %772 = vmatprep.subr.bf16.mxu0 0
        %773 = vmatpush1.bf16.msra.mxu0 %v735
        %774 = vmatprep.subr.bf16.mxu0 0
        %775 = vmatpush1.bf16.msra.mxu0 %v736
        %776 = vmatprep.subr.bf16.mxu0 0
        %777 = vmatpush1.bf16.msra.mxu0 %v737
        %778 = vmatprep.subr.bf16.mxu0 0
        %779 = vmatpush1.bf16.msra.mxu0 %v738
        %780 = vmatprep.subr.bf16.mxu0 0
        %781 = vmatpush1.bf16.msra.mxu0 %v739
        %782 = vmatprep.subr.bf16.mxu0 0
        %783 = vmatpush1.bf16.msra.mxu0 %v740
        %784 = vmatprep.subr.bf16.mxu0 0
        %785 = vmatpush1.bf16.msra.mxu0 %v741
        %786 = vmatprep.subr.bf16.mxu0 0
        %787 = vmatpush1.bf16.msra.mxu0 %v742
        %788 = vmatprep.subr.bf16.mxu0 0
        %789 = vmatpush1.bf16.msra.mxu0 %v743
        %790 = vmatprep.subr.bf16.mxu0 0
        %791 = vmatpush1.bf16.msra.mxu0 %v744
        %792 = vmatprep.subr.bf16.mxu0 0
        %793 = vmatpush1.bf16.msra.mxu0 %v745
        %794 = vmatprep.mubr.bf16.mxu0 %v539
        %795 = vmatmul.mubr.bf16.gmra.mrb[0].mxu0 %v538
        %v796 = vpop.f32.mrb[0].mxu0
        %v797 = vadd.f32 %v344, %v796
        %v798 = vpop.f32.mrb[0].mxu0
        %v799 = vpop.f32.mrb[0].mxu0
        %v800 = vadd.f32 %v344, %v799
        %v801 = vpop.f32.mrb[0].mxu0
        %802 = vmatprep.mubr.bf16.mxu0 %v541
        %803 = vmatmul.mubr.bf16.gmra.mrb[0].mxu0 %v540
        %v804 = vpop.f32.mrb[0].mxu0
        %v805 = vadd.f32 %v344, %v804
        %v806 = vpop.f32.mrb[0].mxu0
        %v807 = vpop.f32.mrb[0].mxu0
        %v808 = vadd.f32 %v344, %v807
        %v809 = vpop.f32.mrb[0].mxu0
        %810 = vmatprep.mubr.bf16.mxu0 %v543
        %811 = vmatmul.mubr.bf16.gmra.mrb[0].mxu0 %v542
        %v812 = vpop.f32.mrb[0].mxu0
        %v813 = vadd.f32 %v344, %v812
        %v814 = vpop.f32.mrb[0].mxu0
        %v815 = vpop.f32.mrb[0].mxu0
        %v816 = vadd.f32 %v344, %v815
        %v817 = vpop.f32.mrb[0].mxu0
        %818 = vmatprep.mubr.bf16.mxu0 %v545
        %819 = vmatmul.mubr.bf16.gmra.mrb[0].mxu0 %v544
        %v820 = vpop.f32.mrb[0].mxu0
        %v821 = vadd.f32 %v344, %v820
        %v822 = vpop.f32.mrb[0].mxu0
        %v823 = vpop.f32.mrb[0].mxu0
        %v824 = vadd.f32 %v344, %v823
        %v825 = vpop.f32.mrb[0].mxu0
        %826 = vmatprep.mubr.bf16.mxu0 %v547
        %827 = vmatmul.mubr.bf16.gmra.mrb[0].mxu0 %v546
        %v828 = vpop.f32.mrb[0].mxu0
        %v829 = vadd.f32 %v344, %v828
        %v830 = vpop.f32.mrb[0].mxu0
        %v831 = vpop.f32.mrb[0].mxu0
        %v832 = vadd.f32 %v344, %v831
        %v833 = vpop.f32.mrb[0].mxu0
        %834 = vmatprep.mubr.bf16.mxu0 %v549
        %835 = vmatmul.mubr.bf16.gmra.mrb[0].mxu0 %v548
        %v836 = vpop.f32.mrb[0].mxu0
        %v837 = vadd.f32 %v344, %v836
        %v838 = vpop.f32.mrb[0].mxu0
        %v839 = vpop.f32.mrb[0].mxu0
        %v840 = vadd.f32 %v344, %v839
        %v841 = vpop.f32.mrb[0].mxu0
        %842 = vmatprep.mubr.bf16.mxu0 %v551
        %843 = vmatmul.mubr.bf16.gmra.mrb[0].mxu0 %v550
        %v844 = vpop.f32.mrb[0].mxu0
        %v845 = vadd.f32 %v344, %v844
        %v846 = vpop.f32.mrb[0].mxu0
        %v847 = vpop.f32.mrb[0].mxu0
        %v848 = vadd.f32 %v344, %v847
        %v849 = vpop.f32.mrb[0].mxu0
        %850 = vmatprep.mubr.bf16.mxu0 %v553
        %851 = vmatmul.mubr.bf16.gmra.mrb[0].mxu0 %v552
        %v852 = vpop.f32.mrb[0].mxu0
        %v853 = vadd.f32 %v344, %v852
        %v854 = vpop.f32.mrb[0].mxu0
        %v855 = vpop.f32.mrb[0].mxu0
        %v856 = vadd.f32 %v344, %v855
        %v857 = vpop.f32.mrb[0].mxu0
        %858 = vmatprep.mubr.bf16.mxu0 %v555
        %859 = vmatmul.mubr.bf16.gmra.mrb[0].mxu0 %v554
        %v860 = vpop.f32.mrb[0].mxu0
        %v861 = vadd.f32 %v344, %v860
        %v862 = vpop.f32.mrb[0].mxu0
        %v863 = vpop.f32.mrb[0].mxu0
        %v864 = vadd.f32 %v344, %v863
        %v865 = vpop.f32.mrb[0].mxu0
        %866 = vmatprep.mubr.bf16.mxu0 %v557
        %867 = vmatmul.mubr.bf16.gmra.mrb[0].mxu0 %v556
        %v868 = vpop.f32.mrb[0].mxu0
        %v869 = vadd.f32 %v344, %v868
        %v870 = vpop.f32.mrb[0].mxu0
        %v871 = vpop.f32.mrb[0].mxu0
        %v872 = vadd.f32 %v344, %v871
        %v873 = vpop.f32.mrb[0].mxu0
        %874 = vmatprep.mubr.bf16.mxu0 %v559
        %875 = vmatmul.mubr.bf16.gmra.mrb[0].mxu0 %v558
        %v876 = vpop.f32.mrb[0].mxu0
        %v877 = vadd.f32 %v344, %v876
        %v878 = vpop.f32.mrb[0].mxu0
        %v879 = vpop.f32.mrb[0].mxu0
        %v880 = vadd.f32 %v344, %v879
        %v881 = vpop.f32.mrb[0].mxu0
        %882 = vmatprep.mubr.bf16.mxu0 %v561
        %883 = vmatmul.mubr.bf16.gmra.mrb[0].mxu0 %v560
        %v884 = vpop.f32.mrb[0].mxu0
        %v885 = vadd.f32 %v344, %v884
        %v886 = vpop.f32.mrb[0].mxu0
        %v887 = vpop.f32.mrb[0].mxu0
        %v888 = vadd.f32 %v344, %v887
        %v889 = vpop.f32.mrb[0].mxu0
        %890 = vmatprep.mubr.bf16.mxu0 %v563
        %891 = vmatmul.mubr.bf16.gmra.mrb[0].mxu0 %v562
        %v892 = vpop.f32.mrb[0].mxu0
        %v893 = vadd.f32 %v344, %v892
        %v894 = vpop.f32.mrb[0].mxu0
        %v895 = vpop.f32.mrb[0].mxu0
        %v896 = vadd.f32 %v344, %v895
        %v897 = vpop.f32.mrb[0].mxu0
        %898 = vmatprep.mubr.bf16.mxu0 %v565
        %899 = vmatmul.mubr.bf16.gmra.mrb[0].mxu0 %v564
        %v900 = vpop.f32.mrb[0].mxu0
        %v901 = vadd.f32 %v344, %v900
        %v902 = vpop.f32.mrb[0].mxu0
        %v903 = vpop.f32.mrb[0].mxu0
        %v904 = vadd.f32 %v344, %v903
        %v905 = vpop.f32.mrb[0].mxu0
        %906 = vmatprep.mubr.bf16.mxu0 %v567
        %907 = vmatmul.mubr.bf16.gmra.mrb[0].mxu0 %v566
        %v908 = vpop.f32.mrb[0].mxu0
        %v909 = vadd.f32 %v344, %v908
        %v910 = vpop.f32.mrb[0].mxu0
        %v911 = vpop.f32.mrb[0].mxu0
        %v912 = vadd.f32 %v344, %v911
        %v913 = vpop.f32.mrb[0].mxu0
        %914 = vmatprep.mubr.bf16.mxu0 %v569
        %915 = vmatmul.mubr.bf16.gmra.mrb[0].mxu0 %v568
        %v916 = vpop.f32.mrb[0].mxu0
        %v917 = vadd.f32 %v344, %v916
        %v918 = vpop.f32.mrb[0].mxu0
        %v919 = vpop.f32.mrb[0].mxu0
        %v920 = vadd.f32 %v344, %v919
        %v921 = vpop.f32.mrb[0].mxu0
        %922 = vmatprep.mubr.bf16.mxu0 %v571
        %923 = vmatmul.mubr.bf16.gmra.mrb[0].mxu0 %v570
        %v924 = vpop.f32.mrb[0].mxu0
        %v925 = vadd.f32 %v344, %v924
        %v926 = vpop.f32.mrb[0].mxu0
        %v927 = vpop.f32.mrb[0].mxu0
        %v928 = vadd.f32 %v344, %v927
        %v929 = vpop.f32.mrb[0].mxu0
        %930 = vmatprep.mubr.bf16.mxu0 %v573
        %931 = vmatmul.mubr.bf16.gmra.mrb[0].mxu0 %v572
        %v932 = vpop.f32.mrb[0].mxu0
        %v933 = vadd.f32 %v344, %v932
        %v934 = vpop.f32.mrb[0].mxu0
        %v935 = vpop.f32.mrb[0].mxu0
        %v936 = vadd.f32 %v344, %v935
        %v937 = vpop.f32.mrb[0].mxu0
        %938 = vmatprep.mubr.bf16.mxu0 %v575
        %939 = vmatmul.mubr.bf16.gmra.mrb[0].mxu0 %v574
        %v940 = vpop.f32.mrb[0].mxu0
        %v941 = vadd.f32 %v344, %v940
        %v942 = vpop.f32.mrb[0].mxu0
        %v943 = vpop.f32.mrb[0].mxu0
        %v944 = vadd.f32 %v344, %v943
        %v945 = vpop.f32.mrb[0].mxu0
        %946 = vmatprep.mubr.bf16.mxu0 %v577
        %947 = vmatmul.mubr.bf16.gmra.mrb[0].mxu0 %v576
        %v948 = vpop.f32.mrb[0].mxu0
        %v949 = vadd.f32 %v344, %v948
        %v950 = vpop.f32.mrb[0].mxu0
        %v951 = vpop.f32.mrb[0].mxu0
        %v952 = vadd.f32 %v344, %v951
        %v953 = vpop.f32.mrb[0].mxu0
        %954 = vmatprep.mubr.bf16.mxu0 %v579
        %955 = vmatmul.mubr.bf16.gmra.mrb[0].mxu0 %v578
        %v956 = vpop.f32.mrb[0].mxu0
        %v957 = vadd.f32 %v344, %v956
        %v958 = vpop.f32.mrb[0].mxu0
        %v959 = vpop.f32.mrb[0].mxu0
        %v960 = vadd.f32 %v344, %v959
        %v961 = vpop.f32.mrb[0].mxu0
        %962 = vmatprep.mubr.bf16.mxu0 %v581
        %963 = vmatmul.mubr.bf16.gmra.mrb[0].mxu0 %v580
        %v964 = vpop.f32.mrb[0].mxu0
        %v965 = vadd.f32 %v344, %v964
        %v966 = vpop.f32.mrb[0].mxu0
        %v967 = vpop.f32.mrb[0].mxu0
        %v968 = vadd.f32 %v344, %v967
        %v969 = vpop.f32.mrb[0].mxu0
        %970 = vmatprep.mubr.bf16.mxu0 %v583
        %971 = vmatmul.mubr.bf16.gmra.mrb[0].mxu0 %v582
        %v972 = vpop.f32.mrb[0].mxu0
        %v973 = vadd.f32 %v344, %v972
        %v974 = vpop.f32.mrb[0].mxu0
        %v975 = vpop.f32.mrb[0].mxu0
        %v976 = vadd.f32 %v344, %v975
        %v977 = vpop.f32.mrb[0].mxu0
        %978 = vmatprep.mubr.bf16.mxu0 %v585
        %979 = vmatmul.mubr.bf16.gmra.mrb[0].mxu0 %v584
        %v980 = vpop.f32.mrb[0].mxu0
        %v981 = vadd.f32 %v344, %v980
        %v982 = vpop.f32.mrb[0].mxu0
        %v983 = vpop.f32.mrb[0].mxu0
        %v984 = vadd.f32 %v344, %v983
        %v985 = vpop.f32.mrb[0].mxu0
        %986 = vmatprep.mubr.bf16.mxu0 %v587
        %987 = vmatmul.mubr.bf16.gmra.mrb[0].mxu0 %v586
        %v988 = vpop.f32.mrb[0].mxu0
        %v989 = vadd.f32 %v344, %v988
        %v990 = vpop.f32.mrb[0].mxu0
        %v991 = vpop.f32.mrb[0].mxu0
        %v992 = vadd.f32 %v344, %v991
        %v993 = vpop.f32.mrb[0].mxu0
        %994 = vmatprep.mubr.bf16.mxu0 %v589
        %995 = vmatmul.mubr.bf16.gmra.mrb[0].mxu0 %v588
        %v996 = vpop.f32.mrb[0].mxu0
        %v997 = vadd.f32 %v344, %v996
        %v998 = vpop.f32.mrb[0].mxu0
        %v999 = vpop.f32.mrb[0].mxu0
        %v1000 = vadd.f32 %v344, %v999
        %v1001 = vpop.f32.mrb[0].mxu0
        %1002 = vmatprep.mubr.bf16.mxu0 %v591
        %1003 = vmatmul.mubr.bf16.gmra.mrb[0].mxu0 %v590
        %v1004 = vpop.f32.mrb[0].mxu0
        %v1005 = vadd.f32 %v344, %v1004
        %v1006 = vpop.f32.mrb[0].mxu0
        %v1007 = vpop.f32.mrb[0].mxu0
        %v1008 = vadd.f32 %v344, %v1007
        %v1009 = vpop.f32.mrb[0].mxu0
        %1010 = vmatprep.mubr.bf16.mxu0 %v593
        %1011 = vmatmul.mubr.bf16.gmra.mrb[0].mxu0 %v592
        %v1012 = vpop.f32.mrb[0].mxu0
        %v1013 = vadd.f32 %v344, %v1012
        %v1014 = vpop.f32.mrb[0].mxu0
        %v1015 = vpop.f32.mrb[0].mxu0
        %v1016 = vadd.f32 %v344, %v1015
        %v1017 = vpop.f32.mrb[0].mxu0
        %1018 = vmatprep.mubr.bf16.mxu0 %v595
        %1019 = vmatmul.mubr.bf16.gmra.mrb[0].mxu0 %v594
        %v1020 = vpop.f32.mrb[0].mxu0
        %v1021 = vadd.f32 %v344, %v1020
        %v1022 = vpop.f32.mrb[0].mxu0
        %v1023 = vpop.f32.mrb[0].mxu0
        %v1024 = vadd.f32 %v344, %v1023
        %v1025 = vpop.f32.mrb[0].mxu0
        %1026 = vmatprep.mubr.bf16.mxu0 %v597
        %1027 = vmatmul.mubr.bf16.gmra.mrb[0].mxu0 %v596
        %v1028 = vpop.f32.mrb[0].mxu0
        %v1029 = vadd.f32 %v344, %v1028
        %v1030 = vpop.f32.mrb[0].mxu0
        %v1031 = vpop.f32.mrb[0].mxu0
        %v1032 = vadd.f32 %v344, %v1031
        %v1033 = vpop.f32.mrb[0].mxu0
        %1034 = vmatprep.mubr.bf16.mxu0 %v599
        %1035 = vmatmul.mubr.bf16.gmra.mrb[0].mxu0 %v598
        %v1036 = vpop.f32.mrb[0].mxu0
        %v1037 = vadd.f32 %v344, %v1036
        %v1038 = vpop.f32.mrb[0].mxu0
        %v1039 = vpop.f32.mrb[0].mxu0
        %v1040 = vadd.f32 %v344, %v1039
        %v1041 = vpop.f32.mrb[0].mxu0
        %1042 = vmatprep.mubr.bf16.mxu0 %v601
        %1043 = vmatmul.mubr.bf16.gmra.mrb[0].mxu0 %v600
        %v1044 = vpop.f32.mrb[0].mxu0
        %v1045 = vadd.f32 %v344, %v1044
        %v1046 = vpop.f32.mrb[0].mxu0
        %v1047 = vpop.f32.mrb[0].mxu0
        %v1048 = vadd.f32 %v344, %v1047
        %v1049 = vpop.f32.mrb[0].mxu0
        %1050 = vdwg.mxu0
        %v1051 = vmax.f32 %v797, 0.0
        %v1052 = vmax.f32 %v800, 0.0
        %v1053 = vmax.f32 %v805, 0.0
        %v1054 = vmax.f32 %v808, 0.0
        %v1055 = vmax.f32 %v813, 0.0
        %v1056 = vmax.f32 %v816, 0.0
        %v1057 = vmax.f32 %v821, 0.0
        %v1058 = vmax.f32 %v824, 0.0
        %v1059 = vmax.f32 %v829, 0.0
        %v1060 = vmax.f32 %v832, 0.0
        %v1061 = vmax.f32 %v837, 0.0
        %v1062 = vmax.f32 %v840, 0.0
        %v1063 = vmax.f32 %v845, 0.0
        %v1064 = vmax.f32 %v848, 0.0
        %v1065 = vmax.f32 %v853, 0.0
        %v1066 = vmax.f32 %v856, 0.0
        %v1067 = vmax.f32 %v861, 0.0
        %v1068 = vmax.f32 %v864, 0.0
        %v1069 = vmax.f32 %v869, 0.0
        %v1070 = vmax.f32 %v872, 0.0
        %v1071 = vmax.f32 %v877, 0.0
        %v1072 = vmax.f32 %v880, 0.0
        %v1073 = vmax.f32 %v885, 0.0
        %v1074 = vmax.f32 %v888, 0.0
        %v1075 = vmax.f32 %v893, 0.0
        %v1076 = vmax.f32 %v896, 0.0
        %v1077 = vmax.f32 %v901, 0.0
        %v1078 = vmax.f32 %v904, 0.0
        %v1079 = vmax.f32 %v909, 0.0
        %v1080 = vmax.f32 %v912, 0.0
        %v1081 = vmax.f32 %v917, 0.0
        %v1082 = vmax.f32 %v920, 0.0
        %v1083 = vmax.f32 %v925, 0.0
        %v1084 = vmax.f32 %v928, 0.0
        %v1085 = vmax.f32 %v933, 0.0
        %v1086 = vmax.f32 %v936, 0.0
        %v1087 = vmax.f32 %v941, 0.0
        %v1088 = vmax.f32 %v944, 0.0
        %v1089 = vmax.f32 %v949, 0.0
        %v1090 = vmax.f32 %v952, 0.0
        %v1091 = vmax.f32 %v957, 0.0
        %v1092 = vmax.f32 %v960, 0.0
        %v1093 = vmax.f32 %v965, 0.0
        %v1094 = vmax.f32 %v968, 0.0
        %v1095 = vmax.f32 %v973, 0.0
        %v1096 = vmax.f32 %v976, 0.0
        %v1097 = vmax.f32 %v981, 0.0
        %v1098 = vmax.f32 %v984, 0.0
        %v1099 = vmax.f32 %v989, 0.0
        %v1100 = vmax.f32 %v992, 0.0
        %v1101 = vmax.f32 %v997, 0.0
        %v1102 = vmax.f32 %v1000, 0.0
        %v1103 = vmax.f32 %v1005, 0.0
        %v1104 = vmax.f32 %v1008, 0.0
        %v1105 = vmax.f32 %v1013, 0.0
        %v1106 = vmax.f32 %v1016, 0.0
        %v1107 = vmax.f32 %v1021, 0.0
        %v1108 = vmax.f32 %v1024, 0.0
        %v1109 = vmax.f32 %v1029, 0.0
        %v1110 = vmax.f32 %v1032, 0.0
        %v1111 = vmax.f32 %v1037, 0.0
        %v1112 = vmax.f32 %v1040, 0.0
        %v1113 = vmax.f32 %v1045, 0.0
        %v1114 = vmax.f32 %v1048, 0.0
        %v1115 = vpack.c.bf16 %v1052, %v1051
        %v1116 = vpack.c.bf16 %v1054, %v1053
        %v1117 = vpack.c.bf16 %v1056, %v1055
        %v1118 = vpack.c.bf16 %v1058, %v1057
        %v1119 = vpack.c.bf16 %v1060, %v1059
        %v1120 = vpack.c.bf16 %v1062, %v1061
        %v1121 = vpack.c.bf16 %v1064, %v1063
        %v1122 = vpack.c.bf16 %v1066, %v1065
        %v1123 = vpack.c.bf16 %v1068, %v1067
        %v1124 = vpack.c.bf16 %v1070, %v1069
        %v1125 = vpack.c.bf16 %v1072, %v1071
        %v1126 = vpack.c.bf16 %v1074, %v1073
        %v1127 = vpack.c.bf16 %v1076, %v1075
        %v1128 = vpack.c.bf16 %v1078, %v1077
        %v1129 = vpack.c.bf16 %v1080, %v1079
        %v1130 = vpack.c.bf16 %v1082, %v1081
        %v1131 = vpack.c.bf16 %v1084, %v1083
        %v1132 = vpack.c.bf16 %v1086, %v1085
        %v1133 = vpack.c.bf16 %v1088, %v1087
        %v1134 = vpack.c.bf16 %v1090, %v1089
        %v1135 = vpack.c.bf16 %v1092, %v1091
        %v1136 = vpack.c.bf16 %v1094, %v1093
        %v1137 = vpack.c.bf16 %v1096, %v1095
        %v1138 = vpack.c.bf16 %v1098, %v1097
        %v1139 = vpack.c.bf16 %v1100, %v1099
        %v1140 = vpack.c.bf16 %v1102, %v1101
        %v1141 = vpack.c.bf16 %v1104, %v1103
        %v1142 = vpack.c.bf16 %v1106, %v1105
        %v1143 = vpack.c.bf16 %v1108, %v1107
        %v1144 = vpack.c.bf16 %v1110, %v1109
        %v1145 = vpack.c.bf16 %v1112, %v1111
        %v1146 = vpack.c.bf16 %v1114, %v1113
        %v1179 = vunpack.c.l.b16 %v1115
        %v1180 = vunpack.c.h.b16 %v1115
        %v1181 = vunpack.c.l.b16 %v1116
        %v1182 = vunpack.c.h.b16 %v1116
        %v1183 = vunpack.c.l.b16 %v1117
        %v1184 = vunpack.c.h.b16 %v1117
        %v1185 = vunpack.c.l.b16 %v1118
        %v1186 = vunpack.c.h.b16 %v1118
        %v1187 = vunpack.c.l.b16 %v1119
        %v1188 = vunpack.c.h.b16 %v1119
        %v1189 = vunpack.c.l.b16 %v1120
        %v1190 = vunpack.c.h.b16 %v1120
        %v1191 = vunpack.c.l.b16 %v1121
        %v1192 = vunpack.c.h.b16 %v1121
        %v1193 = vunpack.c.l.b16 %v1122
        %v1194 = vunpack.c.h.b16 %v1122
        %v1195 = vunpack.c.l.b16 %v1123
        %v1196 = vunpack.c.h.b16 %v1123
        %v1197 = vunpack.c.l.b16 %v1124
        %v1198 = vunpack.c.h.b16 %v1124
        %v1199 = vunpack.c.l.b16 %v1125
        %v1200 = vunpack.c.h.b16 %v1125
        %v1201 = vunpack.c.l.b16 %v1126
        %v1202 = vunpack.c.h.b16 %v1126
        %v1203 = vunpack.c.l.b16 %v1127
        %v1204 = vunpack.c.h.b16 %v1127
        %v1205 = vunpack.c.l.b16 %v1128
        %v1206 = vunpack.c.h.b16 %v1128
        %v1207 = vunpack.c.l.b16 %v1129
        %v1208 = vunpack.c.h.b16 %v1129
        %v1209 = vunpack.c.l.b16 %v1130
        %v1210 = vunpack.c.h.b16 %v1130
        %v1211 = vunpack.c.l.b16 %v1131
        %v1212 = vunpack.c.h.b16 %v1131
        %v1213 = vunpack.c.l.b16 %v1132
        %v1214 = vunpack.c.h.b16 %v1132
        %v1215 = vunpack.c.l.b16 %v1133
        %v1216 = vunpack.c.h.b16 %v1133
        %v1217 = vunpack.c.l.b16 %v1134
        %v1218 = vunpack.c.h.b16 %v1134
        %v1219 = vunpack.c.l.b16 %v1135
        %v1220 = vunpack.c.h.b16 %v1135
        %v1221 = vunpack.c.l.b16 %v1136
        %v1222 = vunpack.c.h.b16 %v1136
        %v1223 = vunpack.c.l.b16 %v1137
        %v1224 = vunpack.c.h.b16 %v1137
        %v1225 = vunpack.c.l.b16 %v1138
        %v1226 = vunpack.c.h.b16 %v1138
        %v1227 = vunpack.c.l.b16 %v1139
        %v1228 = vunpack.c.h.b16 %v1139
        %v1229 = vunpack.c.l.b16 %v1140
        %v1230 = vunpack.c.h.b16 %v1140
        %v1231 = vunpack.c.l.b16 %v1141
        %v1232 = vunpack.c.h.b16 %v1141
        %v1233 = vunpack.c.l.b16 %v1142
        %v1234 = vunpack.c.h.b16 %v1142
        %v1235 = vunpack.c.l.b16 %v1143
        %v1236 = vunpack.c.h.b16 %v1143
        %v1237 = vunpack.c.l.b16 %v1144
        %v1238 = vunpack.c.h.b16 %v1144
        %v1239 = vunpack.c.l.b16 %v1145
        %v1240 = vunpack.c.h.b16 %v1145
        %v1241 = vunpack.c.l.b16 %v1146
        %v1242 = vunpack.c.h.b16 %v1146
        %v1243 = vpack.c.b16 %v1179, %v1179
        %v1244 = vpack.c.b16 %v1180, %v1180
        %v1245 = vpack.c.b16 %v1181, %v1181
        %v1246 = vpack.c.b16 %v1182, %v1182
        %v1247 = vpack.c.b16 %v1183, %v1183
        %v1248 = vpack.c.b16 %v1184, %v1184
        %v1249 = vpack.c.b16 %v1185, %v1185
        %v1250 = vpack.c.b16 %v1186, %v1186
        %v1251 = vpack.c.b16 %v1187, %v1187
        %v1252 = vpack.c.b16 %v1188, %v1188
        %v1253 = vpack.c.b16 %v1189, %v1189
        %v1254 = vpack.c.b16 %v1190, %v1190
        %v1255 = vpack.c.b16 %v1191, %v1191
        %v1256 = vpack.c.b16 %v1192, %v1192
        %v1257 = vpack.c.b16 %v1193, %v1193
        %v1258 = vpack.c.b16 %v1194, %v1194
        %v1259 = vpack.c.b16 %v1195, %v1195
        %v1260 = vpack.c.b16 %v1196, %v1196
        %v1261 = vpack.c.b16 %v1197, %v1197
        %v1262 = vpack.c.b16 %v1198, %v1198
        %v1263 = vpack.c.b16 %v1199, %v1199
        %v1264 = vpack.c.b16 %v1200, %v1200
        %v1265 = vpack.c.b16 %v1201, %v1201
        %v1266 = vpack.c.b16 %v1202, %v1202
        %v1267 = vpack.c.b16 %v1203, %v1203
        %v1268 = vpack.c.b16 %v1204, %v1204
        %v1269 = vpack.c.b16 %v1205, %v1205
        %v1270 = vpack.c.b16 %v1206, %v1206
        %v1271 = vpack.c.b16 %v1207, %v1207
        %v1272 = vpack.c.b16 %v1208, %v1208
        %v1273 = vpack.c.b16 %v1209, %v1209
        %v1274 = vpack.c.b16 %v1210, %v1210
        %v1275 = vpack.c.b16 %v1211, %v1211
        %v1276 = vpack.c.b16 %v1212, %v1212
        %v1277 = vpack.c.b16 %v1213, %v1213
        %v1278 = vpack.c.b16 %v1214, %v1214
        %v1279 = vpack.c.b16 %v1215, %v1215
        %v1280 = vpack.c.b16 %v1216, %v1216
        %v1281 = vpack.c.b16 %v1217, %v1217
        %v1282 = vpack.c.b16 %v1218, %v1218
        %v1283 = vpack.c.b16 %v1219, %v1219
        %v1284 = vpack.c.b16 %v1220, %v1220
        %v1285 = vpack.c.b16 %v1221, %v1221
        %v1286 = vpack.c.b16 %v1222, %v1222
        %v1287 = vpack.c.b16 %v1223, %v1223
        %v1288 = vpack.c.b16 %v1224, %v1224
        %v1289 = vpack.c.b16 %v1225, %v1225
        %v1290 = vpack.c.b16 %v1226, %v1226
        %v1291 = vpack.c.b16 %v1227, %v1227
        %v1292 = vpack.c.b16 %v1228, %v1228
        %v1293 = vpack.c.b16 %v1229, %v1229
        %v1294 = vpack.c.b16 %v1230, %v1230
        %v1295 = vpack.c.b16 %v1231, %v1231
        %v1296 = vpack.c.b16 %v1232, %v1232
        %v1297 = vpack.c.b16 %v1233, %v1233
        %v1298 = vpack.c.b16 %v1234, %v1234
        %v1299 = vpack.c.b16 %v1235, %v1235
        %v1300 = vpack.c.b16 %v1236, %v1236
        %v1301 = vpack.c.b16 %v1237, %v1237
        %v1302 = vpack.c.b16 %v1238, %v1238
        %v1303 = vpack.c.b16 %v1239, %v1239
        %v1304 = vpack.c.b16 %v1240, %v1240
        %v1305 = vpack.c.b16 %v1241, %v1241
        %v1306 = vpack.c.b16 %v1242, %v1242
        %1371 = vst [vmem:[%s236] sm:$0xf] %v1243
        %1372 = vst [vmem:[%s236 + $0x4] sm:$0xf] %v1244
        %1373 = vst [vmem:[%s236 + $0x8] sm:$0xf] %v1245
        %1374 = vst [vmem:[%s236 + $0xc] sm:$0xf] %v1246
        %1375 = vst [vmem:[%s236 + $0x10] sm:$0xf] %v1247
        %1376 = vst [vmem:[%s236 + $0x14] sm:$0xf] %v1248
        %1377 = vst [vmem:[%s236 + $0x18] sm:$0xf] %v1249
        %1378 = vst [vmem:[%s236 + $0x1c] sm:$0xf] %v1250
        %1379 = vst [vmem:[%s236 + $0x20] sm:$0xf] %v1251
        %1380 = vst [vmem:[%s236 + $0x24] sm:$0xf] %v1252
        %1381 = vst [vmem:[%s236 + $0x28] sm:$0xf] %v1253
        %1382 = vst [vmem:[%s236 + $0x2c] sm:$0xf] %v1254
        %1383 = vst [vmem:[%s236 + $0x30] sm:$0xf] %v1255
        %1384 = vst [vmem:[%s236 + $0x34] sm:$0xf] %v1256
        %1385 = vst [vmem:[%s236 + $0x38] sm:$0xf] %v1257
        %1386 = vst [vmem:[%s236 + $0x3c] sm:$0xf] %v1258
        %1387 = vst [vmem:[%s236 + $0x40] sm:$0xf] %v1259
        %1388 = vst [vmem:[%s236 + $0x44] sm:$0xf] %v1260
        %1389 = vst [vmem:[%s236 + $0x48] sm:$0xf] %v1261
        %1390 = vst [vmem:[%s236 + $0x4c] sm:$0xf] %v1262
        %1391 = vst [vmem:[%s236 + $0x50] sm:$0xf] %v1263
        %1392 = vst [vmem:[%s236 + $0x54] sm:$0xf] %v1264
        %1393 = vst [vmem:[%s236 + $0x58] sm:$0xf] %v1265
        %1394 = vst [vmem:[%s236 + $0x5c] sm:$0xf] %v1266
        %1395 = vst [vmem:[%s236 + $0x60] sm:$0xf] %v1267
        %1396 = vst [vmem:[%s236 + $0x64] sm:$0xf] %v1268
        %1397 = vst [vmem:[%s236 + $0x68] sm:$0xf] %v1269
        %1398 = vst [vmem:[%s236 + $0x6c] sm:$0xf] %v1270
        %1399 = vst [vmem:[%s236 + $0x70] sm:$0xf] %v1271
        %1400 = vst [vmem:[%s236 + $0x74] sm:$0xf] %v1272
        %1401 = vst [vmem:[%s236 + $0x78] sm:$0xf] %v1273
        %1402 = vst [vmem:[%s236 + $0x7c] sm:$0xf] %v1274
        %1403 = vst [vmem:[%s236 + $0x80] sm:$0xf] %v1275
        %1404 = vst [vmem:[%s236 + $0x84] sm:$0xf] %v1276
        %1405 = vst [vmem:[%s236 + $0x88] sm:$0xf] %v1277
        %1406 = vst [vmem:[%s236 + $0x8c] sm:$0xf] %v1278
        %1407 = vst [vmem:[%s236 + $0x90] sm:$0xf] %v1279
        %1408 = vst [vmem:[%s236 + $0x94] sm:$0xf] %v1280
        %1409 = vst [vmem:[%s236 + $0x98] sm:$0xf] %v1281
        %1410 = vst [vmem:[%s236 + $0x9c] sm:$0xf] %v1282
        %1411 = vst [vmem:[%s236 + $0xa0] sm:$0xf] %v1283
        %1412 = vst [vmem:[%s236 + $0xa4] sm:$0xf] %v1284
        %1413 = vst [vmem:[%s236 + $0xa8] sm:$0xf] %v1285
        %1414 = vst [vmem:[%s236 + $0xac] sm:$0xf] %v1286
        %1415 = vst [vmem:[%s236 + $0xb0] sm:$0xf] %v1287
        %1416 = vst [vmem:[%s236 + $0xb4] sm:$0xf] %v1288
        %1417 = vst [vmem:[%s236 + $0xb8] sm:$0xf] %v1289
        %1418 = vst [vmem:[%s236 + $0xbc] sm:$0xf] %v1290
        %1419 = vst [vmem:[%s236 + $0xc0] sm:$0xf] %v1291
        %1420 = vst [vmem:[%s236 + $0xc4] sm:$0xf] %v1292
        %1421 = vst [vmem:[%s236 + $0xc8] sm:$0xf] %v1293
        %1422 = vst [vmem:[%s236 + $0xcc] sm:$0xf] %v1294
        %1423 = vst [vmem:[%s236 + $0xd0] sm:$0xf] %v1295
        %1424 = vst [vmem:[%s236 + $0xd4] sm:$0xf] %v1296
        %1425 = vst [vmem:[%s236 + $0xd8] sm:$0xf] %v1297
        %1426 = vst [vmem:[%s236 + $0xdc] sm:$0xf] %v1298
        %1427 = vst [vmem:[%s236 + $0xe0] sm:$0xf] %v1299
        %1428 = vst [vmem:[%s236 + $0xe4] sm:$0xf] %v1300
        %1429 = vst [vmem:[%s236 + $0xe8] sm:$0xf] %v1301
        %1430 = vst [vmem:[%s236 + $0xec] sm:$0xf] %v1302
        %1431 = vst [vmem:[%s236 + $0xf0] sm:$0xf] %v1303
        %1432 = vst [vmem:[%s236 + $0xf4] sm:$0xf] %v1304
        %1433 = vst [vmem:[%s236 + $0xf8] sm:$0xf] %v1305
        %1434 = vst [vmem:[%s236 + $0xfc] sm:$0xf] %v1306
        %s1435 = sand.u32 %s121, 1
        %s1436 = scalar_lea.sflag [#allocation4], %s1435
        %s1437 = sand.u32 %s121, 1
        %s1438 = smul.addr %s1437, 256
        %s1439 = scalar_lea.vmem [#allocation7], %s1438
        // Predicated region
        $region41: #{tpu_custom_call.1} parent=31 // pred_check
          %p1440 = pneg %p131
        $region42: #{tpu_custom_call.1} parent=31 // pred_check_branch
          %1442 = sbr.rel (%p1440) target = $region44
        $region43: #{tpu_custom_call.1} parent=31 // pred_region
          %s1443 = smul.u32 64, %s25
          %s1445 = ssub.s32 4096, 4096
          %1446 = vsyncadd %s1436, %s1445
          %s1447 = sadd.s32 %s26, %s1443
          %s1448 = smul.addr %s1447, 64
          %s1449 = scalar_lea.hbm %s3, %s1448
          %s1450 = sshll.u32 %s1439, 4
          %s1451 = int_to_ptr.vmem [resolvable:$true] %s1450
          %1456 = dma.vmem_to_hbm [thread:$0]  %s1451, 4096, %s1449, %s1436, 64, 64, 4
        $region44: #{tpu_custom_call.1} parent=31 // pred_fallthru
          _
      $region32: #{tpu_custom_call.1} parent=5 // pred_fallthru
        _
      %p1457 = scmp.le.s32.totalorder 2, %s16
      // Predicated region
      $region45: #{tpu_custom_call.1} parent=5 // pred_check
        %p1458 = pneg %p1457
      $region46: #{tpu_custom_call.1} parent=5 // pred_check_branch
        %1460 = sbr.rel (%p1458) target = $region48
      $region47: #{tpu_custom_call.1} parent=5 // pred_region
        %s1461 = ssub.s32 %s16, 2
        // Predicated region
        $region49: #{tpu_custom_call.1} parent=47 // pred_check
          %p1462 = pneg %p137
        $region50: #{tpu_custom_call.1} parent=47 // pred_check_branch
          %1464 = sbr.rel (%p1462) target = $region52
        $region51: #{tpu_custom_call.1} parent=47 // pred_region
          %s1465 = sand.u32 %s122, 1
          %s1466 = scalar_lea.sflag [#allocation4], %s1465
          %s1467 = sand.u32 %s122, 1
          %s1468 = smul.addr %s1467, 256
          %s1469 = scalar_lea.vmem [#allocation7], %s1468
          %1470 = dma.done %s1466, 4096
        $region52: #{tpu_custom_call.1} parent=47 // pred_fallthru
          _
      $region48: #{tpu_custom_call.1} parent=5 // pred_fallthru
        _
    $region6: #{tpu_custom_call.1} parent=1 // loop_footer
      %s20 = sadd.s32 1, %s16
    $region7: #{tpu_custom_call.1} parent=1 // loop_footer_branch
      %15 = sbr.rel target = $region3
    $region8: #{tpu_custom_call.1} parent=1 // loop_exit
      _
    %1471 = vsyncpa [#allocation3], 1
    %s1472 = scalar_lea.sflag [#allocation3], 1
    %1473 = vsyncpa %s1472, 1
    %1474 = vsyncpa [#allocation6], 1
    %1475 = vsyncpa [#allocation4], 1
    %s1476 = scalar_lea.sflag [#allocation4], 1
    %1477 = vsyncpa %s1476, 1

</llo_original>
